<compile_context>
chip_gen: v7x
topology: tpu7x:2x2x1
jax: 0.10.0
libtpu: 0.0.40
codegen_flags: <defaults>
</compile_context>

<pallas_src>
import functools
import math

import jax
import jax.numpy as jnp
from jax.experimental import pallas as pl
from jax.experimental.pallas import tpu as pltpu


def _mha_kernel(q_ref, e_ref, wqkv_ref, wo_ref, we_w_ref, we_b_ref, out_ref,
                *, n_heads, key_dim, val_dim, norm_factor):
    """One grid step == one batch element; all heads fused inside."""
    H, K, V = n_heads, key_dim, val_dim
    q = q_ref[0]                                    # (N, D) f32
    N = q.shape[0]

    # ---- fused QKV projection: one MXU call, bf16 in / f32 accumulate ----
    #   (H*(2K+V), D) . (N, D)^T -> (H*(2K+V), N)
    qkv_t = jax.lax.dot_general(
        wqkv_ref[...], q.astype(jnp.bfloat16),
        (((1,), (1,)), ((), ())),
        preferred_element_type=jnp.float32)

    # Per-head slices are tile-aligned row blocks; reshapes only touch leading
    # dims (layout-preserving, free).
    q_t = qkv_t[0:H * K].reshape(H, K, N)           # (H, K, N) == Q^T per head
    k_t = qkv_t[H * K:2 * H * K].reshape(H, K, N)   # (H, K, N) == K^T per head
    v_t = qkv_t[2 * H * K:].reshape(H, V, N)        # (H, V, N) == V^T per head

    # ---- edge term: Linear(E -> H), movedim(-1, 0), tanh (kept in f32) ----
    e2d = e_ref[0]                                  # (N*N, E), flattened in wrapper
    e1 = jax.lax.dot_general(we_w_ref[...], e2d,
                             (((1,), (1,)), ((), ())),
                             preferred_element_type=jnp.float32)   # (H, N*N)
    e_comp = jnp.tanh(e1 + we_b_ref[...]).reshape(H, N, N)

    # ---- compatibility + softmax over keys ----
    q_h = jnp.swapaxes(q_t, 1, 2)                   # (H, N, K) minor-dims transpose (XLU)
    compat = norm_factor * jnp.einsum(
        'hnk,hkm->hnm',
        q_h.astype(jnp.bfloat16), k_t.astype(jnp.bfloat16),
        preferred_element_type=jnp.float32)         # (H, N, N)
    compat = compat + e_comp
    # TODO(synk): masked (-inf) attention path of the reference is not implemented.
    m = jnp.max(compat, axis=-1, keepdims=True)
    p = jnp.exp(compat - m)
    denom = jnp.sum(p, axis=-1, keepdims=True)
    attn = p * pl.reciprocal(denom, approx=True)    # EUP slot, off the VALU

    # ---- heads (kept transposed) + fused output projection ----
    heads_t = jnp.einsum('hvm,hnm->hvn',
                         v_t.astype(jnp.bfloat16), attn.astype(jnp.bfloat16),
                         preferred_element_type=jnp.float32)       # (H, V, N)
    heads2 = heads_t.reshape(H * V, N)              # leading-dims merge (free)
    out = jnp.dot(heads2.T.astype(jnp.bfloat16), wo_ref[...],
                  preferred_element_type=jnp.float32)              # (N, E)

    # NOTE: E=32 < 128 here so this store is a masked partial store; production
    # configs should keep embed_dim a multiple of 128 for a lane-dense out_spec.
    out_ref[0] = out.astype(out_ref.dtype)


def multi_head_attention(q, embeds, params):
    B, N, D = q.shape
    H, _, Kd = params['W_query'].shape
    Vd = params['W_val'].shape[-1]
    E = params['W_out'].shape[-1]
    norm_factor = 1.0 / math.sqrt(Kd)

    # --- wrapper-side layout plumbing (free; keeps relayouts out of the kernel) ---
    # Fused, transposed QKV weight: rows = [Q heads | K heads | V heads],
    # each head a contiguous, tile-aligned block of rows.
    wq_t = jnp.transpose(params['W_query'], (0, 2, 1)).reshape(H * Kd, D)
    wk_t = jnp.transpose(params['W_key'], (0, 2, 1)).reshape(H * Kd, D)
    wv_t = jnp.transpose(params['W_val'], (0, 2, 1)).reshape(H * Vd, D)
    w_qkv_t = jnp.concatenate([wq_t, wk_t, wv_t], axis=0).astype(jnp.bfloat16)

    # Output projection weight pre-reshaped host-side to (H*Vd, E).
    w_out_flat = params['W_out'].reshape(H * Vd, E).astype(jnp.bfloat16)

    # Edge embeddings flattened outside the kernel.
    embeds_flat = embeds.reshape(B, N * N, E)

    kernel = functools.partial(_mha_kernel, n_heads=H, key_dim=Kd, val_dim=Vd,
                               norm_factor=norm_factor)

    # grid=(B,) "parallel": on v7x this maps one batch element per TensorCore.
    # For production N, the embeds input should additionally be tiled over
    # query rows (block (1, tq*N, E), grid (B, N//tq)) and vmem_limit_bytes
    # set explicitly so the double-buffered edge tile fits 64 MiB VMEM.
    out = pl.pallas_call(
        kernel,
        out_shape=jax.ShapeDtypeStruct((B, N, E), q.dtype),
        grid=(B,),
        in_specs=[
            pl.BlockSpec((1, N, D), lambda b: (b, 0, 0)),              # q
            pl.BlockSpec((1, N * N, E), lambda b: (b, 0, 0)),          # embeds (flat)
            pl.BlockSpec((H * (2 * Kd + Vd), D), lambda b: (0, 0)),    # fused W_qkv^T
            pl.BlockSpec((H * Vd, E), lambda b: (0, 0)),               # W_out flat
            pl.BlockSpec((H, E), lambda b: (0, 0)),                    # W_edge1 weight
            pl.BlockSpec((H, 1), lambda b: (0, 0)),                    # W_edge1 bias
        ],
        out_specs=pl.BlockSpec((1, N, E), lambda b: (b, 0, 0)),
        compiler_params=pltpu.CompilerParams(
            dimension_semantics=("parallel",)),
    )(q, embeds_flat, w_qkv_t, w_out_flat,
      params['W_edge1_w'], params['W_edge1_b'])
    return [out, embeds]


def mha_reference(q, embeds, params):
    """Pure-JAX port of the PyTorch forward (h = q, mask = None)."""
    H = params['W_query'].shape[0]
    B, N, D = q.shape
    E = params['W_out'].shape[-1]
    Vd = params['W_val'].shape[-1]
    norm = 1.0 / math.sqrt(params['W_query'].shape[-1])

    qflat = q.reshape(-1, D)
    Q = jnp.matmul(qflat, params['W_query']).reshape(H, B, N, -1)
    K = jnp.matmul(qflat, params['W_key']).reshape(H, B, N, -1)
    V = jnp.matmul(qflat, params['W_val']).reshape(H, B, N, -1)

    e1 = embeds @ params['W_edge1_w'].T + params['W_edge1_b'][:, 0]
    e_comp = jnp.tanh(jnp.moveaxis(e1, -1, 0))            # (H, B, N, N)

    compat = norm * jnp.matmul(Q, jnp.swapaxes(K, -1, -2)) + e_comp
    attn = jax.nn.softmax(compat, axis=-1)
    heads = jnp.matmul(attn, V)                           # (H, B, N, Vd)
    out = (jnp.transpose(heads, (1, 2, 0, 3)).reshape(-1, H * Vd)
           @ params['W_out'].reshape(-1, E)).reshape(B, N, E)
    return [out, embeds]


def init_params(key, n_heads, input_dim, embed_dim):
    val_dim = embed_dim // n_heads
    key_dim = val_dim
    ks = jax.random.split(key, 6)

    def u(k, shape, stdv):
        return jax.random.uniform(k, shape, jnp.float32, -stdv, stdv)

    return {
        'W_query': u(ks[0], (n_heads, input_dim, key_dim), 1.0 / math.sqrt(key_dim)),
        'W_key':   u(ks[1], (n_heads, input_dim, key_dim), 1.0 / math.sqrt(key_dim)),
        'W_val':   u(ks[2], (n_heads, input_dim, val_dim), 1.0 / math.sqrt(val_dim)),
        'W_out':   u(ks[3], (n_heads, val_dim, embed_dim), 1.0 / math.sqrt(embed_dim)),
        'W_edge1_w': u(ks[4], (n_heads, embed_dim), 1.0 / math.sqrt(embed_dim)),
        'W_edge1_b': u(ks[5], (n_heads, 1), 1.0 / math.sqrt(n_heads)),
    }


if __name__ == "__main__":
    n_heads, input_dim, embed_dim = 4, 16, 32
    batch, n_nodes = 2, 8   # graph_size == n_query == n_nodes (h defaults to q)

    root = jax.random.PRNGKey(0)
    kp, kq, ke = jax.random.split(root, 3)
    params = init_params(kp, n_heads, input_dim, embed_dim)
    q = jax.random.normal(kq, (batch, n_nodes, input_dim), jnp.float32)
    embeds = jax.random.normal(ke, (batch, n_nodes, n_nodes, embed_dim), jnp.float32)

    out, emb_out = multi_head_attention(q, embeds, params)
    out = jax.block_until_ready(out)

    ref_out, _ = mha_reference(q, embeds, params)
    assert out.shape == (batch, n_nodes, embed_dim)
    # Tolerance loosened vs the pure-f32 reference: kernel uses bf16 MXU inputs
    # (f32 accumulation) and the EUP approximate reciprocal, per perf feedback.
    assert jnp.allclose(out, ref_out, rtol=5e-2, atol=5e-2), "mismatch vs reference"
    assert jnp.array_equal(emb_out, embeds)

    print("KERNEL_OK")
</pallas_src>

<mosaic_0001>
module attributes {stable_mosaic.version = 11 : i64} {
  func.func @_mha_kernel(%arg0: i32, %arg1: memref<1x8x16xf32, #tpu.memory_space<vmem>>, %arg2: memref<1x64x32xf32, #tpu.memory_space<vmem>>, %arg3: memref<96x16xbf16, #tpu.memory_space<vmem>>, %arg4: memref<32x32xbf16, #tpu.memory_space<vmem>>, %arg5: memref<4x32xf32, #tpu.memory_space<vmem>>, %arg6: memref<4x1xf32, #tpu.memory_space<vmem>>, %arg7: memref<1x8x32xf32, #tpu.memory_space<vmem>>) attributes {dimension_semantics = [#tpu.dimension_semantics<parallel>], iteration_bounds = array<i64: 2>, scalar_prefetch = 0 : i64, scratch_operands = 0 : i64, tpu.core_type = #tpu.core_type<tc>, window_params = [{transform_indices = @transform_0, window_bounds = array<i64: 1, 8, 16>}, {transform_indices = @transform_1, window_bounds = array<i64: 1, 64, 32>}, {pipeline_mode = #tpu.pipeline_mode<synchronous>, transform_indices = @transform_2, window_bounds = array<i64: 96, 16>}, {pipeline_mode = #tpu.pipeline_mode<synchronous>, transform_indices = @transform_3, window_bounds = array<i64: 32, 32>}, {pipeline_mode = #tpu.pipeline_mode<synchronous>, transform_indices = @transform_4, window_bounds = array<i64: 4, 32>}, {pipeline_mode = #tpu.pipeline_mode<synchronous>, transform_indices = @transform_5, window_bounds = array<i64: 4, 1>}, {transform_indices = @transform_6, window_bounds = array<i64: 1, 8, 32>}]} {
    %c0 = arith.constant 0 : index
    %c0_0 = arith.constant 0 : index
    %c0_1 = arith.constant 0 : index
    %0 = vector.load %arg1[%c0, %c0_0, %c0_1] : memref<1x8x16xf32, #tpu.memory_space<vmem>>, vector<1x8x16xf32>
    %1 = vector.shape_cast %0 : vector<1x8x16xf32> to vector<8x16xf32>
    %c0_2 = arith.constant 0 : index
    %c0_3 = arith.constant 0 : index
    %2 = vector.load %arg3[%c0_2, %c0_3] : memref<96x16xbf16, #tpu.memory_space<vmem>>, vector<96x16xbf16>
    %3 = arith.truncf %1 : vector<8x16xf32> to vector<8x16xbf16>
    %cst = arith.constant dense<0.000000e+00> : vector<96x8xf32>
    %4 = tpu.matmul %2, %3, %cst {dimension_numbers = #tpu.dot_dimension_numbers<[1], [1], [0], [0], [0, 0, 1, 0], [], []>} : vector<96x16xbf16>, vector<8x16xbf16>, vector<96x8xf32> -> vector<96x8xf32>
    %5 = vector.extract_strided_slice %4 {offsets = [0, 0], sizes = [32, 8], strides = [1, 1]} : vector<96x8xf32> to vector<32x8xf32>
    %6 = vector.shape_cast %5 : vector<32x8xf32> to vector<4x8x8xf32>
    %7 = vector.extract_strided_slice %4 {offsets = [32, 0], sizes = [32, 8], strides = [1, 1]} : vector<96x8xf32> to vector<32x8xf32>
    %8 = vector.shape_cast %7 : vector<32x8xf32> to vector<4x8x8xf32>
    %9 = vector.extract_strided_slice %4 {offsets = [64, 0], sizes = [32, 8], strides = [1, 1]} : vector<96x8xf32> to vector<32x8xf32>
    %10 = vector.shape_cast %9 : vector<32x8xf32> to vector<4x8x8xf32>
    %c0_4 = arith.constant 0 : index
    %c0_5 = arith.constant 0 : index
    %c0_6 = arith.constant 0 : index
    %11 = vector.load %arg2[%c0_4, %c0_5, %c0_6] : memref<1x64x32xf32, #tpu.memory_space<vmem>>, vector<1x64x32xf32>
    %12 = vector.shape_cast %11 : vector<1x64x32xf32> to vector<64x32xf32>
    %c0_7 = arith.constant 0 : index
    %c0_8 = arith.constant 0 : index
    %13 = vector.load %arg5[%c0_7, %c0_8] : memref<4x32xf32, #tpu.memory_space<vmem>>, vector<4x32xf32>
    %cst_9 = arith.constant dense<0.000000e+00> : vector<4x64xf32>
    %14 = tpu.matmul %13, %12, %cst_9 {dimension_numbers = #tpu.dot_dimension_numbers<[1], [1], [0], [0], [0, 0, 1, 0], [], []>} : vector<4x32xf32>, vector<64x32xf32>, vector<4x64xf32> -> vector<4x64xf32>
    %c0_10 = arith.constant 0 : index
    %c0_11 = arith.constant 0 : index
    %15 = vector.load %arg6[%c0_10, %c0_11] : memref<4x1xf32, #tpu.memory_space<vmem>>, vector<4x1xf32>
    %16 = vector.broadcast %15 : vector<4x1xf32> to vector<4x64xf32>
    %17 = arith.addf %14, %16 : vector<4x64xf32>
    %18 = math.tanh %17 : vector<4x64xf32>
    %19 = vector.shape_cast %18 : vector<4x64xf32> to vector<4x8x8xf32>
    %20 = tpu.transpose %6, [0, 2, 1] : vector<4x8x8xf32> -> vector<4x8x8xf32>
    %21 = arith.truncf %20 : vector<4x8x8xf32> to vector<4x8x8xbf16>
    %22 = arith.truncf %8 : vector<4x8x8xf32> to vector<4x8x8xbf16>
    "tpu.trace_start"() <{level = 10 : i32, message = "hnk,hkm->hnm"}> : () -> ()
    %cst_12 = arith.constant dense<0.000000e+00> : vector<4x8x8xf32>
    %23 = tpu.matmul %21, %22, %cst_12 {dimension_numbers = #tpu.dot_dimension_numbers<[2], [1], [1], [2], [0, 0, 0, 1, 1, 2], [0], [0]>} : vector<4x8x8xbf16>, vector<4x8x8xbf16>, vector<4x8x8xf32> -> vector<4x8x8xf32>
    "tpu.trace_stop"() : () -> ()
    %cst_13 = arith.constant 0.353553385 : f32
    %24 = vector.broadcast %cst_13 : f32 to vector<4x8x8xf32>
    %25 = arith.mulf %24, %23 : vector<4x8x8xf32>
    %26 = arith.addf %25, %19 : vector<4x8x8xf32>
    %cst_14 = arith.constant dense<0xFF800000> : vector<4x8xf32>
    %27 = vector.multi_reduction <maximumf>, %26, %cst_14 [2] : vector<4x8x8xf32> to vector<4x8xf32>
    %28 = vector.shape_cast %27 : vector<4x8xf32> to vector<4x8x1xf32>
    %29 = vector.broadcast %28 : vector<4x8x1xf32> to vector<4x8x8xf32>
    %30 = arith.subf %26, %29 : vector<4x8x8xf32>
    %31 = math.exp %30 : vector<4x8x8xf32>
    %cst_15 = arith.constant dense<0.000000e+00> : vector<4x8xf32>
    %32 = vector.multi_reduction <add>, %31, %cst_15 [2] : vector<4x8x8xf32> to vector<4x8xf32>
    %33 = vector.shape_cast %32 : vector<4x8xf32> to vector<4x8x1xf32>
    %34 = tpu.reciprocal %33 {approx = true} : vector<4x8x1xf32> -> vector<4x8x1xf32>
    %35 = vector.broadcast %34 : vector<4x8x1xf32> to vector<4x8x8xf32>
    %36 = arith.mulf %31, %35 : vector<4x8x8xf32>
    %37 = arith.truncf %10 : vector<4x8x8xf32> to vector<4x8x8xbf16>
    %38 = arith.truncf %36 : vector<4x8x8xf32> to vector<4x8x8xbf16>
    "tpu.trace_start"() <{level = 10 : i32, message = "hvm,hnm->hvn"}> : () -> ()
    %cst_16 = arith.constant dense<0.000000e+00> : vector<4x8x8xf32>
    %39 = tpu.matmul %37, %38, %cst_16 {dimension_numbers = #tpu.dot_dimension_numbers<[2], [2], [1], [1], [0, 0, 0, 1, 1, 1], [0], [0]>} : vector<4x8x8xbf16>, vector<4x8x8xbf16>, vector<4x8x8xf32> -> vector<4x8x8xf32>
    "tpu.trace_stop"() : () -> ()
    %40 = vector.shape_cast %39 : vector<4x8x8xf32> to vector<32x8xf32>
    %41 = tpu.transpose %40, [1, 0] : vector<32x8xf32> -> vector<8x32xf32>
    %42 = arith.truncf %41 : vector<8x32xf32> to vector<8x32xbf16>
    %c0_17 = arith.constant 0 : index
    %c0_18 = arith.constant 0 : index
    %43 = vector.load %arg4[%c0_17, %c0_18] : memref<32x32xbf16, #tpu.memory_space<vmem>>, vector<32x32xbf16>
    %cst_19 = arith.constant dense<0.000000e+00> : vector<8x32xf32>
    %44 = tpu.matmul %42, %43, %cst_19 {dimension_numbers = #tpu.dot_dimension_numbers<[1], [0], [0], [1], [0, 0, 1, 1], [], []>} : vector<8x32xbf16>, vector<32x32xbf16>, vector<8x32xf32> -> vector<8x32xf32>
    %c0_20 = arith.constant 0 : index
    %c0_21 = arith.constant 0 : index
    %c0_22 = arith.constant 0 : index
    %45 = vector.load %arg7[%c0_20, %c0_21, %c0_22] : memref<1x8x32xf32, #tpu.memory_space<vmem>>, vector<1x8x32xf32>
    %46 = vector.shape_cast %45 : vector<1x8x32xf32> to vector<8x32xf32>
    %47 = vector.shape_cast %44 : vector<8x32xf32> to vector<1x8x32xf32>
    tpu.vector_store %arg7[%c0_20, %c0_21, %c0_22], %47 {strides = array<i32>} : memref<1x8x32xf32, #tpu.memory_space<vmem>>, vector<1x8x32xf32>,
    return
  }
  func.func @transform_0(%arg0: i32) -> (i32, i32, i32) {
    %c0_i32 = arith.constant 0 : i32
    %c0_i32_0 = arith.constant 0 : i32
    %c0_i32_1 = arith.constant 0 : i32
    return %arg0, %c0_i32, %c0_i32_0 : i32, i32, i32
  }
  func.func @transform_1(%arg0: i32) -> (i32, i32, i32) {
    %c0_i32 = arith.constant 0 : i32
    %c0_i32_0 = arith.constant 0 : i32
    %c0_i32_1 = arith.constant 0 : i32
    return %arg0, %c0_i32, %c0_i32_0 : i32, i32, i32
  }
  func.func @transform_2(%arg0: i32) -> (i32, i32) {
    %c0_i32 = arith.constant 0 : i32
    %c0_i32_0 = arith.constant 0 : i32
    %c0_i32_1 = arith.constant 0 : i32
    return %c0_i32, %c0_i32_0 : i32, i32
  }
  func.func @transform_3(%arg0: i32) -> (i32, i32) {
    %c0_i32 = arith.constant 0 : i32
    %c0_i32_0 = arith.constant 0 : i32
    %c0_i32_1 = arith.constant 0 : i32
    return %c0_i32, %c0_i32_0 : i32, i32
  }
  func.func @transform_4(%arg0: i32) -> (i32, i32) {
    %c0_i32 = arith.constant 0 : i32
    %c0_i32_0 = arith.constant 0 : i32
    %c0_i32_1 = arith.constant 0 : i32
    return %c0_i32, %c0_i32_0 : i32, i32
  }
  func.func @transform_5(%arg0: i32) -> (i32, i32) {
    %c0_i32 = arith.constant 0 : i32
    %c0_i32_0 = arith.constant 0 : i32
    %c0_i32_1 = arith.constant 0 : i32
    return %c0_i32, %c0_i32_0 : i32, i32
  }
  func.func @transform_6(%arg0: i32) -> (i32, i32, i32) {
    %c0_i32 = arith.constant 0 : i32
    %c0_i32_0 = arith.constant 0 : i32
    %c0_i32_1 = arith.constant 0 : i32
    return %arg0, %c0_i32, %c0_i32_0 : i32, i32, i32
  }
}

</mosaic_0001>

<llo_original>
// kernel: tpu_custom_call.1
$region0: #{tpu_custom_call.1}
  #allocation0 [shape = 'u32[]', space=smem, size = 0x4, offset = 0x4, fixed_abs, tag = 'smem constant byte address 0x4 - core index']
  #allocation1 [shape = 'u32[144,128]{1,0:T(1,128)}', space=vmem, size = 0x12000, scoped, tag = 'internal scratch']
  %s0 = inlined_call_operand.vmem [shape: f32[2,8,16], index: 0, kind: input, shape index: {}]
  %s1 = inlined_call_operand.vmem [shape: f32[2,64,32], index: 1, kind: input, shape index: {}]
  %s2 = inlined_call_operand.vmem [shape: bf16[96,16], index: 2, kind: input, shape index: {}]
  %s3 = inlined_call_operand.vmem [shape: bf16[32,32], index: 3, kind: input, shape index: {}]
  %s4 = inlined_call_operand.vmem [shape: f32[4,32], index: 4, kind: input, shape index: {}]
  %s5 = inlined_call_operand.vmem [shape: f32[4,1], index: 5, kind: input, shape index: {}]
  %s6 = inlined_call_operand.hbm [shape: f32[2,8,32], index: 6, kind: output, shape index: {}]
  %s7 = sld [smem:[#allocation0]]
  $region57: #{tpu_custom_call.1} parent=0
    _
  %s9 = ssub.s32 1, %s7
  %s10 = scalar_select 0, %s9, %s7
  $region1: #{tpu_custom_call.1} parent=0
    #allocation2 [shape = 'u8[8192]{0}', space=vmem, size = 0x2000, scoped, tag = 'output window, operand 0']
    #allocation3 [shape = 's32[2]{0}', space=sflag, size = 0x8, scoped, tag = 'scoped memory for tpu_custom_call.1']
    %11 = vsyncpa [#allocation3], 0
    %s12 = scalar_lea.sflag [#allocation3], 1
    %13 = vsyncpa %s12, 0
    loop: start=0, step=1, limit=4
    $region2: #{tpu_custom_call.1} parent=1 // loop_pre_header
      _
    $region3: #{tpu_custom_call.1} parent=1 // loop_header
      %s15 = sphi 0, %s19
      %p16 = scmp.ge.s32.totalorder %s15, 4
      %s25 = sphi 0, %s27
      %s28 = sphi 0, %s25
      %s29 = sphi 0, %s28
      %s45 = sphi 0, %s29
      %s51 = sphi 0, %s53
      %s54 = sphi 0, %s51
      %s55 = sphi 0, %s54
      %s71 = sphi 0, %s55
      %s75 = sphi 0, %s75
      %s77 = sphi 0, %s75
      %s78 = sphi 0, %s77
      %s92 = sphi 0, %s78
      %s96 = sphi 0, %s96
      %s98 = sphi 0, %s96
      %s99 = sphi 0, %s98
      %s113 = sphi 0, %s99
      %s117 = sphi 0, %s117
      %s119 = sphi 0, %s117
      %s120 = sphi 0, %s119
      %s134 = sphi 0, %s120
      %s138 = sphi 0, %s138
      %s140 = sphi 0, %s138
      %s141 = sphi 0, %s140
      %s155 = sphi 0, %s141
      %s161 = sphi 0, %s163
      %s164 = sphi 0, %s161
      %s165 = sphi 0, %s164
      %s181 = sphi 0, %s165
    $region4: #{tpu_custom_call.1} parent=1 // loop_header_branch
      %18 = sbr.rel (%p16) target = $region8
    $region5: #{tpu_custom_call.1} parent=1 // loop_body
      %s20 = ssub.s32 %s15, 1
      %s21 = ssub.s32 %s15, 2
      %s22 = sadd.s32 %s15, 1
      %s23 = ssub.s32 %s15, %s22
      %p24 = scmp.eq.s32.totalorder %s23, 0
      %s26 = sadd.s32 %s25, 1
      %s27 = scalar_select %p24, %s25, %s26
      %p30 = pneg %p24
      %p31 = scmp.eq.s32.totalorder %s15, 1
      %p32 = por %p30, %p31
      %p33 = scmp.ne.s32.totalorder %s25, %s28
      %p34 = scmp.eq.s32.totalorder %s15, 0
      %p35 = por %p33, %p34
      %p36 = scmp.ne.s32.totalorder %s25, %s28
      %p37 = scmp.eq.s32.totalorder %s20, 1
      %p38 = por %p36, %p37
      %p39 = scmp.ne.s32.totalorder %s28, %s29
      %p40 = scmp.eq.s32.totalorder %s20, 0
      %p41 = por %p39, %p40
      %p42 = scmp.ne.s32.totalorder %s28, %s29
      %p43 = scmp.eq.s32.totalorder %s21, 1
      %p44 = por %p42, %p43
      %p46 = scmp.ne.s32.totalorder %s29, %s45
      %p47 = scmp.eq.s32.totalorder %s21, 0
      %p48 = por %p46, %p47
      %s49 = ssub.s32 %s15, %s22
      %p50 = scmp.eq.s32.totalorder %s49, 0
      %s52 = sadd.s32 %s51, 1
      %s53 = scalar_select %p50, %s51, %s52
      %p56 = pneg %p50
      %p57 = scmp.eq.s32.totalorder %s15, 1
      %p58 = por %p56, %p57
      %p59 = scmp.ne.s32.totalorder %s51, %s54
      %p60 = scmp.eq.s32.totalorder %s15, 0
      %p61 = por %p59, %p60
      %p62 = scmp.ne.s32.totalorder %s51, %s54
      %p63 = scmp.eq.s32.totalorder %s20, 1
      %p64 = por %p62, %p63
      %p65 = scmp.ne.s32.totalorder %s54, %s55
      %p66 = scmp.eq.s32.totalorder %s20, 0
      %p67 = por %p65, %p66
      %p68 = scmp.ne.s32.totalorder %s54, %s55
      %p69 = scmp.eq.s32.totalorder %s21, 1
      %p70 = por %p68, %p69
      %p72 = scmp.ne.s32.totalorder %s55, %s71
      %p73 = scmp.eq.s32.totalorder %s21, 0
      %p74 = por %p72, %p73
      %s76 = sadd.s32 %s75, 1
      %p79 = scmp.eq.s32.totalorder %s15, 1
      %p80 = scmp.ne.s32.totalorder %s75, %s77
      %p81 = scmp.eq.s32.totalorder %s15, 0
      %p82 = por %p80, %p81
      %p83 = scmp.ne.s32.totalorder %s75, %s77
      %p84 = scmp.eq.s32.totalorder %s20, 1
      %p85 = por %p83, %p84
      %p86 = scmp.ne.s32.totalorder %s77, %s78
      %p87 = scmp.eq.s32.totalorder %s20, 0
      %p88 = por %p86, %p87
      %p89 = scmp.ne.s32.totalorder %s77, %s78
      %p90 = scmp.eq.s32.totalorder %s21, 1
      %p91 = por %p89, %p90
      %p93 = scmp.ne.s32.totalorder %s78, %s92
      %p94 = scmp.eq.s32.totalorder %s21, 0
      %p95 = por %p93, %p94
      %s97 = sadd.s32 %s96, 1
      %p100 = scmp.eq.s32.totalorder %s15, 1
      %p101 = scmp.ne.s32.totalorder %s96, %s98
      %p102 = scmp.eq.s32.totalorder %s15, 0
      %p103 = por %p101, %p102
      %p104 = scmp.ne.s32.totalorder %s96, %s98
      %p105 = scmp.eq.s32.totalorder %s20, 1
      %p106 = por %p104, %p105
      %p107 = scmp.ne.s32.totalorder %s98, %s99
      %p108 = scmp.eq.s32.totalorder %s20, 0
      %p109 = por %p107, %p108
      %p110 = scmp.ne.s32.totalorder %s98, %s99
      %p111 = scmp.eq.s32.totalorder %s21, 1
      %p112 = por %p110, %p111
      %p114 = scmp.ne.s32.totalorder %s99, %s113
      %p115 = scmp.eq.s32.totalorder %s21, 0
      %p116 = por %p114, %p115
      %s118 = sadd.s32 %s117, 1
      %p121 = scmp.eq.s32.totalorder %s15, 1
      %p122 = scmp.ne.s32.totalorder %s117, %s119
      %p123 = scmp.eq.s32.totalorder %s15, 0
      %p124 = por %p122, %p123
      %p125 = scmp.ne.s32.totalorder %s117, %s119
      %p126 = scmp.eq.s32.totalorder %s20, 1
      %p127 = por %p125, %p126
      %p128 = scmp.ne.s32.totalorder %s119, %s120
      %p129 = scmp.eq.s32.totalorder %s20, 0
      %p130 = por %p128, %p129
      %p131 = scmp.ne.s32.totalorder %s119, %s120
      %p132 = scmp.eq.s32.totalorder %s21, 1
      %p133 = por %p131, %p132
      %p135 = scmp.ne.s32.totalorder %s120, %s134
      %p136 = scmp.eq.s32.totalorder %s21, 0
      %p137 = por %p135, %p136
      %s139 = sadd.s32 %s138, 1
      %p142 = scmp.eq.s32.totalorder %s15, 1
      %p143 = scmp.ne.s32.totalorder %s138, %s140
      %p144 = scmp.eq.s32.totalorder %s15, 0
      %p145 = por %p143, %p144
      %p146 = scmp.ne.s32.totalorder %s138, %s140
      %p147 = scmp.eq.s32.totalorder %s20, 1
      %p148 = por %p146, %p147
      %p149 = scmp.ne.s32.totalorder %s140, %s141
      %p150 = scmp.eq.s32.totalorder %s20, 0
      %p151 = por %p149, %p150
      %p152 = scmp.ne.s32.totalorder %s140, %s141
      %p153 = scmp.eq.s32.totalorder %s21, 1
      %p154 = por %p152, %p153
      %p156 = scmp.ne.s32.totalorder %s141, %s155
      %p157 = scmp.eq.s32.totalorder %s21, 0
      %p158 = por %p156, %p157
      %s159 = ssub.s32 %s15, %s22
      %p160 = scmp.eq.s32.totalorder %s159, 0
      %s162 = sadd.s32 %s161, 1
      %s163 = scalar_select %p160, %s161, %s162
      %p166 = pneg %p160
      %p167 = scmp.eq.s32.totalorder %s15, 1
      %p168 = por %p166, %p167
      %p169 = scmp.ne.s32.totalorder %s161, %s164
      %p170 = scmp.eq.s32.totalorder %s15, 0
      %p171 = por %p169, %p170
      %p172 = scmp.ne.s32.totalorder %s161, %s164
      %p173 = scmp.eq.s32.totalorder %s20, 1
      %p174 = por %p172, %p173
      %p175 = scmp.ne.s32.totalorder %s164, %s165
      %p176 = scmp.eq.s32.totalorder %s20, 0
      %p177 = por %p175, %p176
      %p178 = scmp.ne.s32.totalorder %s164, %s165
      %p179 = scmp.eq.s32.totalorder %s21, 1
      %p180 = por %p178, %p179
      %p182 = scmp.ne.s32.totalorder %s165, %s181
      %p183 = scmp.eq.s32.totalorder %s21, 0
      %p184 = por %p182, %p183
      %p185 = scmp.le.s32.totalorder 1, %s15
      %p186 = scmp.lt.s32.totalorder %s15, 3
      %p187 = pnand %p185, %p186
      %p188 = pneg %p187
      // Predicated region
      $region9: #{tpu_custom_call.1} parent=5 // pred_check
        _
      $region10: #{tpu_custom_call.1} parent=5 // pred_check_branch
        %190 = sbr.rel (%p187) target = $region12
      $region11: #{tpu_custom_call.1} parent=5 // pred_region
        %s191 = ssub.s32 %s15, 1
        // Predicated region
        $region13: #{tpu_custom_call.1} parent=11 // pred_check
          %p192 = pneg %p88
        $region14: #{tpu_custom_call.1} parent=11 // pred_check_branch
          %194 = sbr.rel (%p192) target = $region16
        $region15: #{tpu_custom_call.1} parent=11 // pred_region
          _
        $region16: #{tpu_custom_call.1} parent=11 // pred_fallthru
          _
        // Predicated region
        $region17: #{tpu_custom_call.1} parent=11 // pred_check
          %p195 = pneg %p109
        $region18: #{tpu_custom_call.1} parent=11 // pred_check_branch
          %197 = sbr.rel (%p195) target = $region20
        $region19: #{tpu_custom_call.1} parent=11 // pred_region
          _
        $region20: #{tpu_custom_call.1} parent=11 // pred_fallthru
          _
        // Predicated region
        $region21: #{tpu_custom_call.1} parent=11 // pred_check
          %p198 = pneg %p130
        $region22: #{tpu_custom_call.1} parent=11 // pred_check_branch
          %200 = sbr.rel (%p198) target = $region24
        $region23: #{tpu_custom_call.1} parent=11 // pred_region
          _
        $region24: #{tpu_custom_call.1} parent=11 // pred_fallthru
          _
        // Predicated region
        $region25: #{tpu_custom_call.1} parent=11 // pred_check
          %p201 = pneg %p151
        $region26: #{tpu_custom_call.1} parent=11 // pred_check_branch
          %203 = sbr.rel (%p201) target = $region28
        $region27: #{tpu_custom_call.1} parent=11 // pred_region
          _
        $region28: #{tpu_custom_call.1} parent=11 // pred_fallthru
          _
      $region12: #{tpu_custom_call.1} parent=5 // pred_fallthru
        _
      %p204 = scmp.lt.s32.totalorder %s15, 2
      // Predicated region
      $region29: #{tpu_custom_call.1} parent=5 // pred_check
        %p205 = pneg %p204
      $region30: #{tpu_custom_call.1} parent=5 // pred_check_branch
        %207 = sbr.rel (%p205) target = $region32
      $region31: #{tpu_custom_call.1} parent=5 // pred_region
        // Predicated region
        $region33: #{tpu_custom_call.1} parent=31 // pred_check
          %p208 = pneg %p35
        $region34: #{tpu_custom_call.1} parent=31 // pred_check_branch
          %210 = sbr.rel (%p208) target = $region36
        $region35: #{tpu_custom_call.1} parent=31 // pred_region
          %p211 = scmp.lt.s32.totalorder %s15, 1
          %s212 = scalar_select %p211, %s15, 1
          %s213 = smul.addr %s212, 8
          %s214 = scalar_lea.vmem %s0, %s213
        $region36: #{tpu_custom_call.1} parent=31 // pred_fallthru
          _
        // Predicated region
        $region37: #{tpu_custom_call.1} parent=31 // pred_check
          %p215 = pneg %p61
        $region38: #{tpu_custom_call.1} parent=31 // pred_check_branch
          %217 = sbr.rel (%p215) target = $region40
        $region39: #{tpu_custom_call.1} parent=31 // pred_region
          %p218 = scmp.lt.s32.totalorder %s15, 1
          %s219 = scalar_select %p218, %s15, 1
          %s220 = smul.addr %s219, 8
          %s221 = smul.addr %s220, 8
          %s222 = scalar_lea.vmem %s1, %s221
        $region40: #{tpu_custom_call.1} parent=31 // pred_fallthru
          _
      $region32: #{tpu_custom_call.1} parent=5 // pred_fallthru
        _
      %p223 = scmp.le.s32.totalorder 1, %s15
      %p224 = scmp.lt.s32.totalorder %s15, 3
      %p225 = pnand %p223, %p224
      %p226 = pneg %p225
      // Predicated region
      $region41: #{tpu_custom_call.1} parent=5 // pred_check
        _
      $region42: #{tpu_custom_call.1} parent=5 // pred_check_branch
        %228 = sbr.rel (%p225) target = $region44
      $region43: #{tpu_custom_call.1} parent=5 // pred_region
        %s229 = ssub.s32 %s15, 1
        %p230 = scmp.lt.s32.totalorder %s20, 1
        %s231 = scalar_select %p230, %s20, 1
        %s232 = smul.addr %s231, 8
        %s233 = scalar_lea.vmem %s0, %s232
        %p234 = pneg %p41
        %p235 = pneg %p38
        %p236 = scmp.lt.s32.totalorder %s20, 1
        %s237 = scalar_select %p236, %s20, 1
        %s238 = smul.addr %s237, 8
        %s239 = smul.addr %s238, 8
        %s240 = scalar_lea.vmem %s1, %s239
        %p241 = pneg %p67
        %p242 = pneg %p64
        %p243 = pneg %p88
        %p244 = pneg %p85
        %p245 = pneg %p109
        %p246 = pneg %p106
        %p247 = pneg %p130
        %p248 = pneg %p127
        %p249 = pneg %p151
        %p250 = pneg %p148
        %p251 = pneg %p177
        %p252 = pneg %p174
        %s253 = sand.u32 %s164, 1
        %s254 = scalar_lea.sflag [#allocation3], %s253
        %s255 = sand.u32 %s164, 1
        %s256 = smul.addr %s255, 8
        %s257 = scalar_lea.vmem [#allocation2], %s256
        %p258 = scmp.lt.s32.totalorder %s20, 1
        %s259 = scalar_select %p258, %s20, 1
        %s260 = smul.addr %s259, 8
        %s261 = scalar_lea.vmem %s0, %s260
        %p262 = scmp.lt.s32.totalorder %s20, 1
        %s263 = scalar_select %p262, %s20, 1
        %s264 = smul.addr %s263, 8
        %s265 = smul.addr %s264, 8
        %s266 = scalar_lea.vmem %s1, %s265
        %v268 = vld [vmem:[%s261] sm:$0xff]
        %v269 = vld [vmem:[%s2] sm:$0xf]
        %v270 = vld [vmem:[%s2 + $0x4] sm:$0xf]
        %v271 = vld [vmem:[%s2 + $0x8] sm:$0xf]
        %v272 = vld [vmem:[%s2 + $0xc] sm:$0xf]
        %v273 = vld [vmem:[%s2 + $0x10] sm:$0xf]
        %v274 = vld [vmem:[%s2 + $0x14] sm:$0xf]
        %v275 = vld [vmem:[%s2 + $0x18] sm:$0xf]
        %v276 = vld [vmem:[%s2 + $0x1c] sm:$0xf]
        %v277 = vld [vmem:[%s2 + $0x20] sm:$0xf]
        %v278 = vld [vmem:[%s2 + $0x24] sm:$0xf]
        %v279 = vld [vmem:[%s2 + $0x28] sm:$0xf]
        %v280 = vld [vmem:[%s2 + $0x2c] sm:$0xf]
        %v281 = vpack.c.bf16 %v268, %v268
        %v294 = vunpack.c.l.b16 %v269
        %v295 = vunpack.c.l.b16 %v270
        %v296 = vunpack.c.l.b16 %v271
        %v297 = vunpack.c.l.b16 %v272
        %v298 = vunpack.c.l.b16 %v273
        %v299 = vunpack.c.l.b16 %v274
        %v300 = vunpack.c.l.b16 %v275
        %v301 = vunpack.c.l.b16 %v276
        %v302 = vunpack.c.l.b16 %v277
        %v303 = vunpack.c.l.b16 %v278
        %v304 = vunpack.c.l.b16 %v279
        %v305 = vunpack.c.l.b16 %v280
        %v306 = vpack.c.b16 %v295, %v294
        %v307 = vpack.c.b16 %v297, %v296
        %v308 = vpack.c.b16 %v299, %v298
        %v309 = vpack.c.b16 %v301, %v300
        %v310 = vpack.c.b16 %v303, %v302
        %v311 = vpack.c.b16 %v305, %v304
        %vm312 = vcmask 130048
        %v314 = vsel %vm312, %v306, 0
        %v317 = vsel %vm312, %v307, 0
        %v320 = vsel %vm312, %v308, 0
        %v323 = vsel %vm312, %v309, 0
        %v326 = vsel %vm312, %v310, 0
        %v329 = vsel %vm312, %v311, 0
        %v332 = vsel %vm312, %v281, 0
        %334 = vmatprep.subr.bf16.mxu0 0
        %335 = vmatpush1.bf16.xpose.msra.mxu0 %v332
        %336 = vmatprep.subr.bf16.mxu0 0
        %337 = vmatpush1.bf16.xpose.msra.mxu0 0
        %338 = vmatprep.subr.bf16.mxu0 0
        %339 = vmatpush1.bf16.xpose.msra.mxu0 0
        %340 = vmatprep.subr.bf16.mxu0 0
        %341 = vmatpush1.bf16.xpose.msra.mxu0 0
        %342 = vmatprep.subr.bf16.mxu0 0
        %343 = vmatpush1.bf16.xpose.msra.mxu0 0
        %344 = vmatprep.subr.bf16.mxu0 0
        %345 = vmatpush1.bf16.xpose.msra.mxu0 0
        %346 = vmatprep.subr.bf16.mxu0 0
        %347 = vmatpush1.bf16.xpose.msra.mxu0 0
        %348 = vmatprep.subr.bf16.mxu0 0
        %349 = vmatpush1.bf16.xpose.msra.mxu0 0
        %350 = vmatprep.subr.bf16.mxu0 0
        %351 = vmatpush1.bf16.xpose.msra.mxu0 0
        %352 = vmatprep.subr.bf16.mxu0 0
        %353 = vmatpush1.bf16.xpose.msra.mxu0 0
        %354 = vmatprep.subr.bf16.mxu0 0
        %355 = vmatpush1.bf16.xpose.msra.mxu0 0
        %356 = vmatprep.subr.bf16.mxu0 0
        %357 = vmatpush1.bf16.xpose.msra.mxu0 0
        %358 = vmatprep.subr.bf16.mxu0 0
        %359 = vmatpush1.bf16.xpose.msra.mxu0 0
        %360 = vmatprep.subr.bf16.mxu0 0
        %361 = vmatpush1.bf16.xpose.msra.mxu0 0
        %362 = vmatprep.subr.bf16.mxu0 0
        %363 = vmatpush1.bf16.xpose.msra.mxu0 0
        %364 = vmatprep.subr.bf16.mxu0 0
        %365 = vmatpush1.bf16.xpose.msra.mxu0 0
        %366 = vmatprep.mubr.bf16.mxu0 0
        %367 = vmatmul.mubr.bf16.gmra.mrb[0].mxu0 %v314
        %v368 = vpop.f32.mrb[0].mxu0
        %v369 = vadd.f32 0.0, %v368
        %v370 = vpop.f32.mrb[0].mxu0
        %v371 = vpop.f32.mrb[0].mxu0
        %v372 = vadd.f32 0.0, %v371
        %v373 = vpop.f32.mrb[0].mxu0
        %374 = vmatprep.mubr.bf16.mxu0 0
        %375 = vmatmul.mubr.bf16.gmra.mrb[0].mxu0 %v317
        %v376 = vpop.f32.mrb[0].mxu0
        %v377 = vadd.f32 0.0, %v376
        %v378 = vpop.f32.mrb[0].mxu0
        %v379 = vpop.f32.mrb[0].mxu0
        %v380 = vadd.f32 0.0, %v379
        %v381 = vpop.f32.mrb[0].mxu0
        %382 = vmatprep.mubr.bf16.mxu0 0
        %383 = vmatmul.mubr.bf16.gmra.mrb[0].mxu0 %v320
        %v384 = vpop.f32.mrb[0].mxu0
        %v385 = vadd.f32 0.0, %v384
        %v386 = vpop.f32.mrb[0].mxu0
        %v387 = vpop.f32.mrb[0].mxu0
        %v388 = vadd.f32 0.0, %v387
        %v389 = vpop.f32.mrb[0].mxu0
        %390 = vmatprep.mubr.bf16.mxu0 0
        %391 = vmatmul.mubr.bf16.gmra.mrb[0].mxu0 %v323
        %v392 = vpop.f32.mrb[0].mxu0
        %v393 = vadd.f32 0.0, %v392
        %v394 = vpop.f32.mrb[0].mxu0
        %v395 = vpop.f32.mrb[0].mxu0
        %v396 = vadd.f32 0.0, %v395
        %v397 = vpop.f32.mrb[0].mxu0
        %398 = vmatprep.mubr.bf16.mxu0 0
        %399 = vmatmul.mubr.bf16.gmra.mrb[0].mxu0 %v326
        %v400 = vpop.f32.mrb[0].mxu0
        %v401 = vadd.f32 0.0, %v400
        %v402 = vpop.f32.mrb[0].mxu0
        %v403 = vpop.f32.mrb[0].mxu0
        %v404 = vadd.f32 0.0, %v403
        %v405 = vpop.f32.mrb[0].mxu0
        %406 = vmatprep.mubr.bf16.mxu0 0
        %407 = vmatmul.mubr.bf16.gmra.mrb[0].mxu0 %v329
        %v408 = vpop.f32.mrb[0].mxu0
        %v409 = vadd.f32 0.0, %v408
        %v410 = vpop.f32.mrb[0].mxu0
        %v411 = vpop.f32.mrb[0].mxu0
        %v412 = vadd.f32 0.0, %v411
        %v413 = vpop.f32.mrb[0].mxu0
        %414 = vdwg.mxu0
        %v415 = vld [vmem:[%s266] sm:$0xff]
        %v416 = vld [vmem:[%s266 + $0x8] sm:$0xff]
        %v417 = vld [vmem:[%s266 + $0x10] sm:$0xff]
        %v418 = vld [vmem:[%s266 + $0x18] sm:$0xff]
        %v419 = vld [vmem:[%s266 + $0x20] sm:$0xff]
        %v420 = vld [vmem:[%s266 + $0x28] sm:$0xff]
        %v421 = vld [vmem:[%s266 + $0x30] sm:$0xff]
        %v422 = vld [vmem:[%s266 + $0x38] sm:$0xff]
        %v423 = vld [vmem:[%s4] sm:$0xf]
        %v424 = vld [vmem:[%s5] sm:$0xf]
        %426 = vset.pattern.permute.xlu0 0
        %427 = vperm.xlu0 %426, %v424
        %v428 = vpop.permute.xlu0 %427
        %vm430 = vcmask 261120
        %v432 = vsel %vm430, %v423, 0
        %v435 = vsel %vm430, %v415, 0
        %v438 = vsel %vm430, %v416, 0
        %v441 = vsel %vm430, %v417, 0
        %v444 = vsel %vm430, %v418, 0
        %v447 = vsel %vm430, %v419, 0
        %v450 = vsel %vm430, %v420, 0
        %v453 = vsel %vm430, %v421, 0
        %v456 = vsel %vm430, %v422, 0
        %458 = vmatprep.subr.mxu0 0.0
        %459 = vmatpush1.xpose.msra.mxu0 %v435
        %460 = vmatprep.subr.mxu0 0.0
        %461 = vmatpush1.xpose.msra.mxu0 %v438
        %462 = vmatprep.subr.mxu0 0.0
        %463 = vmatpush1.xpose.msra.mxu0 %v441
        %464 = vmatprep.subr.mxu0 0.0
        %465 = vmatpush1.xpose.msra.mxu0 %v444
        %466 = vmatprep.subr.mxu0 0.0
        %467 = vmatpush1.xpose.msra.mxu0 %v447
        %468 = vmatprep.subr.mxu0 0.0
        %469 = vmatpush1.xpose.msra.mxu0 %v450
        %470 = vmatprep.subr.mxu0 0.0
        %471 = vmatpush1.xpose.msra.mxu0 %v453
        %472 = vmatprep.subr.mxu0 0.0
        %473 = vmatpush1.xpose.msra.mxu0 %v456
        %474 = vmatprep.subr.mxu0 0.0
        %475 = vmatpush1.xpose.msra.mxu0 0.0
        %476 = vmatprep.subr.mxu0 0.0
        %477 = vmatpush1.xpose.msra.mxu0 0.0
        %478 = vmatprep.subr.mxu0 0.0
        %479 = vmatpush1.xpose.msra.mxu0 0.0
        %480 = vmatprep.subr.mxu0 0.0
        %481 = vmatpush1.xpose.msra.mxu0 0.0
        %482 = vmatprep.subr.mxu0 0.0
        %483 = vmatpush1.xpose.msra.mxu0 0.0
        %484 = vmatprep.subr.mxu0 0.0
        %485 = vmatpush1.xpose.msra.mxu0 0.0
        %486 = vmatprep.subr.mxu0 0.0
        %487 = vmatpush1.xpose.msra.mxu0 0.0
        %488 = vmatprep.subr.mxu0 0.0
        %489 = vmatpush1.xpose.msra.mxu0 0.0
        %490 = vmatprep.subr.mxu0 0.0
        %491 = vmatpush1.xpose.msra.mxu0 0.0
        %492 = vmatprep.subr.mxu0 0.0
        %493 = vmatpush1.xpose.msra.mxu0 0.0
        %494 = vmatprep.subr.mxu0 0.0
        %495 = vmatpush1.xpose.msra.mxu0 0.0
        %496 = vmatprep.subr.mxu0 0.0
        %497 = vmatpush1.xpose.msra.mxu0 0.0
        %498 = vmatprep.subr.mxu0 0.0
        %499 = vmatpush1.xpose.msra.mxu0 0.0
        %500 = vmatprep.subr.mxu0 0.0
        %501 = vmatpush1.xpose.msra.mxu0 0.0
        %502 = vmatprep.subr.mxu0 0.0
        %503 = vmatpush1.xpose.msra.mxu0 0.0
        %504 = vmatprep.subr.mxu0 0.0
        %505 = vmatpush1.xpose.msra.mxu0 0.0
        %506 = vmatprep.subr.mxu0 0.0
        %507 = vmatpush1.xpose.msra.mxu0 0.0
        %508 = vmatprep.subr.mxu0 0.0
        %509 = vmatpush1.xpose.msra.mxu0 0.0
        %510 = vmatprep.subr.mxu0 0.0
        %511 = vmatpush1.xpose.msra.mxu0 0.0
        %512 = vmatprep.subr.mxu0 0.0
        %513 = vmatpush1.xpose.msra.mxu0 0.0
        %514 = vmatprep.subr.mxu0 0.0
        %515 = vmatpush1.xpose.msra.mxu0 0.0
        %516 = vmatprep.subr.mxu0 0.0
        %517 = vmatpush1.xpose.msra.mxu0 0.0
        %518 = vmatprep.subr.mxu0 0.0
        %519 = vmatpush1.xpose.msra.mxu0 0.0
        %520 = vmatprep.subr.mxu0 0.0
        %521 = vmatpush1.xpose.msra.mxu0 0.0
        %522 = vmatprep.mubr.f32.mxu0 0.0
        %523 = vmatmul.mubr.f32.gmra.mrb[0].mxu0 %v432
        %v524 = vpop.f32.mrb[0].mxu0
        %v525 = vadd.f32 %v428, %v524
        %v526 = vpop.f32.mrb[0].mxu0
        %527 = vdwg.mxu0
        %v528 = vtanh.pop %v525
        %530 = vrot.lane.b32.xlu0 %v528, 120
        %v531 = vpop.permute.xlu0 %530
        %533 = vrot.lane.b32.xlu0 %v528, 112
        %v534 = vpop.permute.xlu0 %533
        %536 = vrot.lane.b32.xlu0 %v528, 104
        %v537 = vpop.permute.xlu0 %536
        %539 = vrot.lane.b32.xlu0 %v528, 96
        %v540 = vpop.permute.xlu0 %539
        %542 = vrot.lane.b32.xlu0 %v528, 88
        %v543 = vpop.permute.xlu0 %542
        %545 = vrot.lane.b32.xlu0 %v528, 80
        %v546 = vpop.permute.xlu0 %545
        %548 = vrot.lane.b32.xlu0 %v528, 72
        %v549 = vpop.permute.xlu0 %548
        %v551 = vcombine.low %v528, %v534
        %v553 = vunpack.c.l.s4 1983009808
        %v554 = vunpack.c.0.s8 %v553
        %v555 = vlaneseq
        %v556 = vshrl.u32 %v555, 7
        %v557 = vsub.s32 %v554, %v556
        %v558 = vrot.slane %v551, %v557
        %v559 = vcombine.low %v531, %v537
        %v561 = vunpack.c.l.s4 1983009808
        %v562 = vunpack.c.0.s8 %v561
        %v563 = vlaneseq
        %v564 = vshrl.u32 %v563, 7
        %v565 = vsub.s32 %v562, %v564
        %v566 = vrot.slane %v559, %v565
        %v567 = vcombine.low %v540, %v546
        %v569 = vunpack.c.l.s4 1983009808
        %v570 = vunpack.c.0.s8 %v569
        %v571 = vlaneseq
        %v572 = vshrl.u32 %v571, 7
        %v573 = vsub.s32 %v570, %v572
        %v574 = vrot.slane %v567, %v573
        %v575 = vcombine.low %v543, %v549
        %v577 = vunpack.c.l.s4 1983009808
        %v578 = vunpack.c.0.s8 %v577
        %v579 = vlaneseq
        %v580 = vshrl.u32 %v579, 7
        %v581 = vsub.s32 %v578, %v580
        %v582 = vrot.slane %v575, %v581
        %v583 = vcombine.low %v558, %v566
        %v584 = vcombine.high %v558, %v566
        %v586 = vunpack.c.l.s4 1934713408
        %v587 = vunpack.c.0.s8 %v586
        %v588 = vlaneseq
        %v589 = vshrl.u32 %v588, 7
        %v590 = vsub.s32 %v587, %v589
        %v591 = vrot.slane %v583, %v590
        %v593 = vunpack.c.l.s4 1934713408
        %v594 = vunpack.c.0.s8 %v593
        %v595 = vlaneseq
        %v596 = vshrl.u32 %v595, 7
        %v597 = vsub.s32 %v594, %v596
        %v598 = vrot.slane %v584, %v597
        %v599 = vcombine.low %v574, %v582
        %v600 = vcombine.high %v574, %v582
        %v602 = vunpack.c.l.s4 1934713408
        %v603 = vunpack.c.0.s8 %v602
        %v604 = vlaneseq
        %v605 = vshrl.u32 %v604, 7
        %v606 = vsub.s32 %v603, %v605
        %v607 = vrot.slane %v599, %v606
        %v609 = vunpack.c.l.s4 1934713408
        %v610 = vunpack.c.0.s8 %v609
        %v611 = vlaneseq
        %v612 = vshrl.u32 %v611, 7
        %v613 = vsub.s32 %v610, %v612
        %v614 = vrot.slane %v600, %v613
        %v615 = vcombine.low %v591, %v607
        %v616 = vcombine.high %v591, %v607
        %v617 = vcombine.low %v598, %v614
        %v618 = vcombine.high %v598, %v614
        %619 = vxpose.xlu0.b32.start [1/16] %v369, 128
        %620 = vxpose.xlu0.b32.cont [2/16] 0.0, 128
        %621 = vxpose.xlu0.b32.cont [3/16] 0.0, 128
        %622 = vxpose.xlu0.b32.cont [4/16] 0.0, 128
        %623 = vxpose.xlu0.b32.cont [5/16] 0.0, 128
        %624 = vxpose.xlu0.b32.cont [6/16] 0.0, 128
        %625 = vxpose.xlu0.b32.cont [7/16] 0.0, 128
        %626 = vxpose.xlu0.b32.cont [8/16] 0.0, 128
        %627 = vxpose.xlu0.b32.cont [9/16] 0.0, 128
        %628 = vxpose.xlu0.b32.cont [10/16] 0.0, 128
        %629 = vxpose.xlu0.b32.cont [11/16] 0.0, 128
        %630 = vxpose.xlu0.b32.cont [12/16] 0.0, 128
        %631 = vxpose.xlu0.b32.cont [13/16] 0.0, 128
        %632 = vxpose.xlu0.b32.cont [14/16] 0.0, 128
        %633 = vxpose.xlu0.b32.cont [15/16] 0.0, 128
        %634 = vxpose.xlu0.b32.end [16/16] 0.0, 128
        %v635 = vpop.trf.xlu0
        %v636 = vpop.trf.xlu0
        %v637 = vpop.trf.xlu0
        %v638 = vpop.trf.xlu0
        %v639 = vpop.trf.xlu0
        %v640 = vpop.trf.xlu0
        %v641 = vpop.trf.xlu0
        %v642 = vpop.trf.xlu0
        %v643 = vpop.trf.xlu0
        %v644 = vpop.trf.xlu0
        %v645 = vpop.trf.xlu0
        %v646 = vpop.trf.xlu0
        %v647 = vpop.trf.xlu0
        %v648 = vpop.trf.xlu0
        %v649 = vpop.trf.xlu0
        %v650 = vpop.trf.xlu0
        %651 = vxpose.xlu0.b32.start [1/16] %v372, 128
        %652 = vxpose.xlu0.b32.cont [2/16] 0.0, 128
        %653 = vxpose.xlu0.b32.cont [3/16] 0.0, 128
        %654 = vxpose.xlu0.b32.cont [4/16] 0.0, 128
        %655 = vxpose.xlu0.b32.cont [5/16] 0.0, 128
        %656 = vxpose.xlu0.b32.cont [6/16] 0.0, 128
        %657 = vxpose.xlu0.b32.cont [7/16] 0.0, 128
        %658 = vxpose.xlu0.b32.cont [8/16] 0.0, 128
        %659 = vxpose.xlu0.b32.cont [9/16] 0.0, 128
        %660 = vxpose.xlu0.b32.cont [10/16] 0.0, 128
        %661 = vxpose.xlu0.b32.cont [11/16] 0.0, 128
        %662 = vxpose.xlu0.b32.cont [12/16] 0.0, 128
        %663 = vxpose.xlu0.b32.cont [13/16] 0.0, 128
        %664 = vxpose.xlu0.b32.cont [14/16] 0.0, 128
        %665 = vxpose.xlu0.b32.cont [15/16] 0.0, 128
        %666 = vxpose.xlu0.b32.end [16/16] 0.0, 128
        %v667 = vpop.trf.xlu0
        %v668 = vpop.trf.xlu0
        %v669 = vpop.trf.xlu0
        %v670 = vpop.trf.xlu0
        %v671 = vpop.trf.xlu0
        %v672 = vpop.trf.xlu0
        %v673 = vpop.trf.xlu0
        %v674 = vpop.trf.xlu0
        %v675 = vpop.trf.xlu0
        %v676 = vpop.trf.xlu0
        %v677 = vpop.trf.xlu0
        %v678 = vpop.trf.xlu0
        %v679 = vpop.trf.xlu0
        %v680 = vpop.trf.xlu0
        %v681 = vpop.trf.xlu0
        %v682 = vpop.trf.xlu0
        %683 = vxpose.xlu0.b32.start [1/16] %v377, 128
        %684 = vxpose.xlu0.b32.cont [2/16] 0.0, 128
        %685 = vxpose.xlu0.b32.cont [3/16] 0.0, 128
        %686 = vxpose.xlu0.b32.cont [4/16] 0.0, 128
        %687 = vxpose.xlu0.b32.cont [5/16] 0.0, 128
        %688 = vxpose.xlu0.b32.cont [6/16] 0.0, 128
        %689 = vxpose.xlu0.b32.cont [7/16] 0.0, 128
        %690 = vxpose.xlu0.b32.cont [8/16] 0.0, 128
        %691 = vxpose.xlu0.b32.cont [9/16] 0.0, 128
        %692 = vxpose.xlu0.b32.cont [10/16] 0.0, 128
        %693 = vxpose.xlu0.b32.cont [11/16] 0.0, 128
        %694 = vxpose.xlu0.b32.cont [12/16] 0.0, 128
        %695 = vxpose.xlu0.b32.cont [13/16] 0.0, 128
        %696 = vxpose.xlu0.b32.cont [14/16] 0.0, 128
        %697 = vxpose.xlu0.b32.cont [15/16] 0.0, 128
        %698 = vxpose.xlu0.b32.end [16/16] 0.0, 128
        %v699 = vpop.trf.xlu0
        %v700 = vpop.trf.xlu0
        %v701 = vpop.trf.xlu0
        %v702 = vpop.trf.xlu0
        %v703 = vpop.trf.xlu0
        %v704 = vpop.trf.xlu0
        %v705 = vpop.trf.xlu0
        %v706 = vpop.trf.xlu0
        %v707 = vpop.trf.xlu0
        %v708 = vpop.trf.xlu0
        %v709 = vpop.trf.xlu0
        %v710 = vpop.trf.xlu0
        %v711 = vpop.trf.xlu0
        %v712 = vpop.trf.xlu0
        %v713 = vpop.trf.xlu0
        %v714 = vpop.trf.xlu0
        %715 = vxpose.xlu0.b32.start [1/16] %v380, 128
        %716 = vxpose.xlu0.b32.cont [2/16] 0.0, 128
        %717 = vxpose.xlu0.b32.cont [3/16] 0.0, 128
        %718 = vxpose.xlu0.b32.cont [4/16] 0.0, 128
        %719 = vxpose.xlu0.b32.cont [5/16] 0.0, 128
        %720 = vxpose.xlu0.b32.cont [6/16] 0.0, 128
        %721 = vxpose.xlu0.b32.cont [7/16] 0.0, 128
        %722 = vxpose.xlu0.b32.cont [8/16] 0.0, 128
        %723 = vxpose.xlu0.b32.cont [9/16] 0.0, 128
        %724 = vxpose.xlu0.b32.cont [10/16] 0.0, 128
        %725 = vxpose.xlu0.b32.cont [11/16] 0.0, 128
        %726 = vxpose.xlu0.b32.cont [12/16] 0.0, 128
        %727 = vxpose.xlu0.b32.cont [13/16] 0.0, 128
        %728 = vxpose.xlu0.b32.cont [14/16] 0.0, 128
        %729 = vxpose.xlu0.b32.cont [15/16] 0.0, 128
        %730 = vxpose.xlu0.b32.end [16/16] 0.0, 128
        %v731 = vpop.trf.xlu0
        %v732 = vpop.trf.xlu0
        %v733 = vpop.trf.xlu0
        %v734 = vpop.trf.xlu0
        %v735 = vpop.trf.xlu0
        %v736 = vpop.trf.xlu0
        %v737 = vpop.trf.xlu0
        %v738 = vpop.trf.xlu0
        %v739 = vpop.trf.xlu0
        %v740 = vpop.trf.xlu0
        %v741 = vpop.trf.xlu0
        %v742 = vpop.trf.xlu0
        %v743 = vpop.trf.xlu0
        %v744 = vpop.trf.xlu0
        %v745 = vpop.trf.xlu0
        %v746 = vpop.trf.xlu0
        %v747 = vpack.c.bf16 %v635, %v635
        %v748 = vpack.c.bf16 %v667, %v667
        %v749 = vpack.c.bf16 %v699, %v699
        %v750 = vpack.c.bf16 %v731, %v731
        %v751 = vpack.c.bf16 %v385, %v385
        %v752 = vpack.c.bf16 %v388, %v388
        %v753 = vpack.c.bf16 %v393, %v393
        %v754 = vpack.c.bf16 %v396, %v396
        %vm755 = vcmask 64512
        %v757 = vsel %vm755, %v747, 0
        %vm759 = vcmask 1043456
        %v761 = vsel %vm759, %v751, 0
        %763 = vmatprep.subr.bf16.mxu0 0
        %764 = vmatpush1.bf16.msra.mxu0 %v761
        %765 = vmatprep.subr.bf16.mxu0 0
        %766 = vmatpush1.bf16.msra.mxu0 0
        %767 = vmatprep.subr.bf16.mxu0 0
        %768 = vmatpush1.bf16.msra.mxu0 0
        %769 = vmatprep.subr.bf16.mxu0 0
        %770 = vmatpush1.bf16.msra.mxu0 0
        %771 = vmatprep.subr.bf16.mxu0 0
        %772 = vmatpush1.bf16.msra.mxu0 0
        %773 = vmatprep.subr.bf16.mxu0 0
        %774 = vmatpush1.bf16.msra.mxu0 0
        %775 = vmatprep.subr.bf16.mxu0 0
        %776 = vmatpush1.bf16.msra.mxu0 0
        %777 = vmatprep.subr.bf16.mxu0 0
        %778 = vmatpush1.bf16.msra.mxu0 0
        %779 = vmatprep.subr.bf16.mxu0 0
        %780 = vmatpush1.bf16.msra.mxu0 0
        %781 = vmatprep.subr.bf16.mxu0 0
        %782 = vmatpush1.bf16.msra.mxu0 0
        %783 = vmatprep.subr.bf16.mxu0 0
        %784 = vmatpush1.bf16.msra.mxu0 0
        %785 = vmatprep.subr.bf16.mxu0 0
        %786 = vmatpush1.bf16.msra.mxu0 0
        %787 = vmatprep.subr.bf16.mxu0 0
        %788 = vmatpush1.bf16.msra.mxu0 0
        %789 = vmatprep.subr.bf16.mxu0 0
        %790 = vmatpush1.bf16.msra.mxu0 0
        %791 = vmatprep.subr.bf16.mxu0 0
        %792 = vmatpush1.bf16.msra.mxu0 0
        %793 = vmatprep.subr.bf16.mxu0 0
        %794 = vmatpush1.bf16.msra.mxu0 0
        %795 = vmatprep.mubr.bf16.mxu0 0
        %796 = vmatmul.mubr.bf16.gmra.mrb[0].mxu0 %v757
        %v797 = vpop.f32.mrb[0].mxu0
        %v798 = vadd.f32 0.0, %v797
        %v799 = vpop.f32.mrb[0].mxu0
        %v800 = vpop.f32.mrb[0].mxu0
        %v801 = vpop.f32.mrb[0].mxu0
        %802 = vdwg.mxu0
        %v804 = vsel %vm755, %v748, 0
        %v807 = vsel %vm759, %v752, 0
        %809 = vmatprep.subr.bf16.mxu0 0
        %810 = vmatpush1.bf16.msra.mxu0 %v807
        %811 = vmatprep.subr.bf16.mxu0 0
        %812 = vmatpush1.bf16.msra.mxu0 0
        %813 = vmatprep.subr.bf16.mxu0 0
        %814 = vmatpush1.bf16.msra.mxu0 0
        %815 = vmatprep.subr.bf16.mxu0 0
        %816 = vmatpush1.bf16.msra.mxu0 0
        %817 = vmatprep.subr.bf16.mxu0 0
        %818 = vmatpush1.bf16.msra.mxu0 0
        %819 = vmatprep.subr.bf16.mxu0 0
        %820 = vmatpush1.bf16.msra.mxu0 0
        %821 = vmatprep.subr.bf16.mxu0 0
        %822 = vmatpush1.bf16.msra.mxu0 0
        %823 = vmatprep.subr.bf16.mxu0 0
        %824 = vmatpush1.bf16.msra.mxu0 0
        %825 = vmatprep.subr.bf16.mxu0 0
        %826 = vmatpush1.bf16.msra.mxu0 0
        %827 = vmatprep.subr.bf16.mxu0 0
        %828 = vmatpush1.bf16.msra.mxu0 0
        %829 = vmatprep.subr.bf16.mxu0 0
        %830 = vmatpush1.bf16.msra.mxu0 0
        %831 = vmatprep.subr.bf16.mxu0 0
        %832 = vmatpush1.bf16.msra.mxu0 0
        %833 = vmatprep.subr.bf16.mxu0 0
        %834 = vmatpush1.bf16.msra.mxu0 0
        %835 = vmatprep.subr.bf16.mxu0 0
        %836 = vmatpush1.bf16.msra.mxu0 0
        %837 = vmatprep.subr.bf16.mxu0 0
        %838 = vmatpush1.bf16.msra.mxu0 0
        %839 = vmatprep.subr.bf16.mxu0 0
        %840 = vmatpush1.bf16.msra.mxu0 0
        %841 = vmatprep.mubr.bf16.mxu0 0
        %842 = vmatmul.mubr.bf16.gmra.mrb[0].mxu0 %v804
        %v843 = vpop.f32.mrb[0].mxu0
        %v844 = vadd.f32 0.0, %v843
        %v845 = vpop.f32.mrb[0].mxu0
        %v846 = vpop.f32.mrb[0].mxu0
        %v847 = vpop.f32.mrb[0].mxu0
        %848 = vdwg.mxu0
        %v850 = vsel %vm755, %v749, 0
        %v853 = vsel %vm759, %v753, 0
        %855 = vmatprep.subr.bf16.mxu0 0
        %856 = vmatpush1.bf16.msra.mxu0 %v853
        %857 = vmatprep.subr.bf16.mxu0 0
        %858 = vmatpush1.bf16.msra.mxu0 0
        %859 = vmatprep.subr.bf16.mxu0 0
        %860 = vmatpush1.bf16.msra.mxu0 0
        %861 = vmatprep.subr.bf16.mxu0 0
        %862 = vmatpush1.bf16.msra.mxu0 0
        %863 = vmatprep.subr.bf16.mxu0 0
        %864 = vmatpush1.bf16.msra.mxu0 0
        %865 = vmatprep.subr.bf16.mxu0 0
        %866 = vmatpush1.bf16.msra.mxu0 0
        %867 = vmatprep.subr.bf16.mxu0 0
        %868 = vmatpush1.bf16.msra.mxu0 0
        %869 = vmatprep.subr.bf16.mxu0 0
        %870 = vmatpush1.bf16.msra.mxu0 0
        %871 = vmatprep.subr.bf16.mxu0 0
        %872 = vmatpush1.bf16.msra.mxu0 0
        %873 = vmatprep.subr.bf16.mxu0 0
        %874 = vmatpush1.bf16.msra.mxu0 0
        %875 = vmatprep.subr.bf16.mxu0 0
        %876 = vmatpush1.bf16.msra.mxu0 0
        %877 = vmatprep.subr.bf16.mxu0 0
        %878 = vmatpush1.bf16.msra.mxu0 0
        %879 = vmatprep.subr.bf16.mxu0 0
        %880 = vmatpush1.bf16.msra.mxu0 0
        %881 = vmatprep.subr.bf16.mxu0 0
        %882 = vmatpush1.bf16.msra.mxu0 0
        %883 = vmatprep.subr.bf16.mxu0 0
        %884 = vmatpush1.bf16.msra.mxu0 0
        %885 = vmatprep.subr.bf16.mxu0 0
        %886 = vmatpush1.bf16.msra.mxu0 0
        %887 = vmatprep.mubr.bf16.mxu0 0
        %888 = vmatmul.mubr.bf16.gmra.mrb[0].mxu0 %v850
        %v889 = vpop.f32.mrb[0].mxu0
        %v890 = vadd.f32 0.0, %v889
        %v891 = vpop.f32.mrb[0].mxu0
        %v892 = vpop.f32.mrb[0].mxu0
        %v893 = vpop.f32.mrb[0].mxu0
        %894 = vdwg.mxu0
        %v896 = vsel %vm755, %v750, 0
        %v899 = vsel %vm759, %v754, 0
        %901 = vmatprep.subr.bf16.mxu0 0
        %902 = vmatpush1.bf16.msra.mxu0 %v899
        %903 = vmatprep.subr.bf16.mxu0 0
        %904 = vmatpush1.bf16.msra.mxu0 0
        %905 = vmatprep.subr.bf16.mxu0 0
        %906 = vmatpush1.bf16.msra.mxu0 0
        %907 = vmatprep.subr.bf16.mxu0 0
        %908 = vmatpush1.bf16.msra.mxu0 0
        %909 = vmatprep.subr.bf16.mxu0 0
        %910 = vmatpush1.bf16.msra.mxu0 0
        %911 = vmatprep.subr.bf16.mxu0 0
        %912 = vmatpush1.bf16.msra.mxu0 0
        %913 = vmatprep.subr.bf16.mxu0 0
        %914 = vmatpush1.bf16.msra.mxu0 0
        %915 = vmatprep.subr.bf16.mxu0 0
        %916 = vmatpush1.bf16.msra.mxu0 0
        %917 = vmatprep.subr.bf16.mxu0 0
        %918 = vmatpush1.bf16.msra.mxu0 0
        %919 = vmatprep.subr.bf16.mxu0 0
        %920 = vmatpush1.bf16.msra.mxu0 0
        %921 = vmatprep.subr.bf16.mxu0 0
        %922 = vmatpush1.bf16.msra.mxu0 0
        %923 = vmatprep.subr.bf16.mxu0 0
        %924 = vmatpush1.bf16.msra.mxu0 0
        %925 = vmatprep.subr.bf16.mxu0 0
        %926 = vmatpush1.bf16.msra.mxu0 0
        %927 = vmatprep.subr.bf16.mxu0 0
        %928 = vmatpush1.bf16.msra.mxu0 0
        %929 = vmatprep.subr.bf16.mxu0 0
        %930 = vmatpush1.bf16.msra.mxu0 0
        %931 = vmatprep.subr.bf16.mxu0 0
        %932 = vmatpush1.bf16.msra.mxu0 0
        %933 = vmatprep.mubr.bf16.mxu0 0
        %934 = vmatmul.mubr.bf16.gmra.mrb[0].mxu0 %v896
        %v935 = vpop.f32.mrb[0].mxu0
        %v936 = vadd.f32 0.0, %v935
        %v937 = vpop.f32.mrb[0].mxu0
        %v938 = vpop.f32.mrb[0].mxu0
        %v939 = vpop.f32.mrb[0].mxu0
        %940 = vdwg.mxu0
        %v941 = vmul.f32 %v798, 0.35355338
        %v942 = vmul.f32 %v844, 0.35355338
        %v943 = vmul.f32 %v890, 0.35355338
        %v944 = vmul.f32 %v936, 0.35355338
        %v945 = vadd.f32 %v941, %v615
        %v946 = vadd.f32 %v942, %v616
        %v947 = vadd.f32 %v943, %v617
        %v948 = vadd.f32 %v944, %v618
        %v949 = vsel %vm755, %v945, -inf
        %950 = vmax.xlane.f32.xlu0 %v949
        %v951 = vpop.xlane.xlu0 %950
        %v952 = vsel %vm755, %v946, -inf
        %953 = vmax.xlane.f32.xlu0 %v952
        %v954 = vpop.xlane.xlu0 %953
        %v955 = vsel %vm755, %v947, -inf
        %956 = vmax.xlane.f32.xlu0 %v955
        %v957 = vpop.xlane.xlu0 %956
        %v958 = vsel %vm755, %v948, -inf
        %959 = vmax.xlane.f32.xlu0 %v958
        %v960 = vpop.xlane.xlu0 %959
        %v961 = vsub.f32 %v945, %v951
        %v962 = vsub.f32 %v946, %v954
        %v963 = vsub.f32 %v947, %v957
        %v964 = vsub.f32 %v948, %v960
        %v965 = vmul.f32 %v961, 1.442695
        %v966 = vpow.pop %v965
        %v967 = vmul.f32 %v962, 1.442695
        %v968 = vpow.pop %v967
        %v969 = vmul.f32 %v963, 1.442695
        %v970 = vpow.pop %v969
        %v971 = vmul.f32 %v964, 1.442695
        %v972 = vpow.pop %v971
        %v973 = vsel %vm755, %v966, 0.0
        %974 = vadd.xlane.f32.xlu0 %v973
        %v975 = vpop.xlane.xlu0 %974
        %v976 = vsel %vm755, %v968, 0.0
        %977 = vadd.xlane.f32.xlu0 %v976
        %v978 = vpop.xlane.xlu0 %977
        %v979 = vsel %vm755, %v970, 0.0
        %980 = vadd.xlane.f32.xlu0 %v979
        %v981 = vpop.xlane.xlu0 %980
        %v982 = vsel %vm755, %v972, 0.0
        %983 = vadd.xlane.f32.xlu0 %v982
        %v984 = vpop.xlane.xlu0 %983
        %v985 = vrcp.pop %v975
        %v986 = vrcp.pop %v978
        %v987 = vrcp.pop %v981
        %v988 = vrcp.pop %v984
        %v989 = vmul.f32 %v966, %v985
        %v990 = vmul.f32 %v968, %v986
        %v991 = vmul.f32 %v970, %v987
        %v992 = vmul.f32 %v972, %v988
        %v993 = vpack.c.bf16 %v401, %v401
        %v994 = vpack.c.bf16 %v404, %v404
        %v995 = vpack.c.bf16 %v409, %v409
        %v996 = vpack.c.bf16 %v412, %v412
        %v997 = vpack.c.bf16 %v989, %v989
        %v998 = vpack.c.bf16 %v990, %v990
        %v999 = vpack.c.bf16 %v991, %v991
        %v1000 = vpack.c.bf16 %v992, %v992
        %v1002 = vsel %vm755, %v993, 0
        %v1005 = vsel %vm755, %v997, 0
        %1007 = vmatprep.subr.bf16.mxu0 0
        %1008 = vmatpush1.bf16.xpose.msra.mxu0 %v1005
        %1009 = vmatprep.subr.bf16.mxu0 0
        %1010 = vmatpush1.bf16.xpose.msra.mxu0 0
        %1011 = vmatprep.subr.bf16.mxu0 0
        %1012 = vmatpush1.bf16.xpose.msra.mxu0 0
        %1013 = vmatprep.subr.bf16.mxu0 0
        %1014 = vmatpush1.bf16.xpose.msra.mxu0 0
        %1015 = vmatprep.subr.bf16.mxu0 0
        %1016 = vmatpush1.bf16.xpose.msra.mxu0 0
        %1017 = vmatprep.subr.bf16.mxu0 0
        %1018 = vmatpush1.bf16.xpose.msra.mxu0 0
        %1019 = vmatprep.subr.bf16.mxu0 0
        %1020 = vmatpush1.bf16.xpose.msra.mxu0 0
        %1021 = vmatprep.subr.bf16.mxu0 0
        %1022 = vmatpush1.bf16.xpose.msra.mxu0 0
        %1023 = vmatprep.subr.bf16.mxu0 0
        %1024 = vmatpush1.bf16.xpose.msra.mxu0 0
        %1025 = vmatprep.subr.bf16.mxu0 0
        %1026 = vmatpush1.bf16.xpose.msra.mxu0 0
        %1027 = vmatprep.subr.bf16.mxu0 0
        %1028 = vmatpush1.bf16.xpose.msra.mxu0 0
        %1029 = vmatprep.subr.bf16.mxu0 0
        %1030 = vmatpush1.bf16.xpose.msra.mxu0 0
        %1031 = vmatprep.subr.bf16.mxu0 0
        %1032 = vmatpush1.bf16.xpose.msra.mxu0 0
        %1033 = vmatprep.subr.bf16.mxu0 0
        %1034 = vmatpush1.bf16.xpose.msra.mxu0 0
        %1035 = vmatprep.subr.bf16.mxu0 0
        %1036 = vmatpush1.bf16.xpose.msra.mxu0 0
        %1037 = vmatprep.subr.bf16.mxu0 0
        %1038 = vmatpush1.bf16.xpose.msra.mxu0 0
        %1039 = vmatprep.mubr.bf16.mxu0 0
        %1040 = vmatmul.mubr.bf16.gmra.mrb[0].mxu0 %v1002
        %v1041 = vpop.f32.mrb[0].mxu0
        %v1042 = vadd.f32 0.0, %v1041
        %v1043 = vpop.f32.mrb[0].mxu0
        %v1044 = vpop.f32.mrb[0].mxu0
        %v1045 = vpop.f32.mrb[0].mxu0
        %1046 = vdwg.mxu0
        %v1048 = vsel %vm755, %v994, 0
        %v1051 = vsel %vm755, %v998, 0
        %1053 = vmatprep.subr.bf16.mxu0 0
        %1054 = vmatpush1.bf16.xpose.msra.mxu0 %v1051
        %1055 = vmatprep.subr.bf16.mxu0 0
        %1056 = vmatpush1.bf16.xpose.msra.mxu0 0
        %1057 = vmatprep.subr.bf16.mxu0 0
        %1058 = vmatpush1.bf16.xpose.msra.mxu0 0
        %1059 = vmatprep.subr.bf16.mxu0 0
        %1060 = vmatpush1.bf16.xpose.msra.mxu0 0
        %1061 = vmatprep.subr.bf16.mxu0 0
        %1062 = vmatpush1.bf16.xpose.msra.mxu0 0
        %1063 = vmatprep.subr.bf16.mxu0 0
        %1064 = vmatpush1.bf16.xpose.msra.mxu0 0
        %1065 = vmatprep.subr.bf16.mxu0 0
        %1066 = vmatpush1.bf16.xpose.msra.mxu0 0
        %1067 = vmatprep.subr.bf16.mxu0 0
        %1068 = vmatpush1.bf16.xpose.msra.mxu0 0
        %1069 = vmatprep.subr.bf16.mxu0 0
        %1070 = vmatpush1.bf16.xpose.msra.mxu0 0
        %1071 = vmatprep.subr.bf16.mxu0 0
        %1072 = vmatpush1.bf16.xpose.msra.mxu0 0
        %1073 = vmatprep.subr.bf16.mxu0 0
        %1074 = vmatpush1.bf16.xpose.msra.mxu0 0
        %1075 = vmatprep.subr.bf16.mxu0 0
        %1076 = vmatpush1.bf16.xpose.msra.mxu0 0
        %1077 = vmatprep.subr.bf16.mxu0 0
        %1078 = vmatpush1.bf16.xpose.msra.mxu0 0
        %1079 = vmatprep.subr.bf16.mxu0 0
        %1080 = vmatpush1.bf16.xpose.msra.mxu0 0
        %1081 = vmatprep.subr.bf16.mxu0 0
        %1082 = vmatpush1.bf16.xpose.msra.mxu0 0
        %1083 = vmatprep.subr.bf16.mxu0 0
        %1084 = vmatpush1.bf16.xpose.msra.mxu0 0
        %1085 = vmatprep.mubr.bf16.mxu0 0
        %1086 = vmatmul.mubr.bf16.gmra.mrb[0].mxu0 %v1048
        %v1087 = vpop.f32.mrb[0].mxu0
        %v1088 = vadd.f32 0.0, %v1087
        %v1089 = vpop.f32.mrb[0].mxu0
        %v1090 = vpop.f32.mrb[0].mxu0
        %v1091 = vpop.f32.mrb[0].mxu0
        %1092 = vdwg.mxu0
        %v1094 = vsel %vm755, %v995, 0
        %v1097 = vsel %vm755, %v999, 0
        %1099 = vmatprep.subr.bf16.mxu0 0
        %1100 = vmatpush1.bf16.xpose.msra.mxu0 %v1097
        %1101 = vmatprep.subr.bf16.mxu0 0
        %1102 = vmatpush1.bf16.xpose.msra.mxu0 0
        %1103 = vmatprep.subr.bf16.mxu0 0
        %1104 = vmatpush1.bf16.xpose.msra.mxu0 0
        %1105 = vmatprep.subr.bf16.mxu0 0
        %1106 = vmatpush1.bf16.xpose.msra.mxu0 0
        %1107 = vmatprep.subr.bf16.mxu0 0
        %1108 = vmatpush1.bf16.xpose.msra.mxu0 0
        %1109 = vmatprep.subr.bf16.mxu0 0
        %1110 = vmatpush1.bf16.xpose.msra.mxu0 0
        %1111 = vmatprep.subr.bf16.mxu0 0
        %1112 = vmatpush1.bf16.xpose.msra.mxu0 0
        %1113 = vmatprep.subr.bf16.mxu0 0
        %1114 = vmatpush1.bf16.xpose.msra.mxu0 0
        %1115 = vmatprep.subr.bf16.mxu0 0
        %1116 = vmatpush1.bf16.xpose.msra.mxu0 0
        %1117 = vmatprep.subr.bf16.mxu0 0
        %1118 = vmatpush1.bf16.xpose.msra.mxu0 0
        %1119 = vmatprep.subr.bf16.mxu0 0
        %1120 = vmatpush1.bf16.xpose.msra.mxu0 0
        %1121 = vmatprep.subr.bf16.mxu0 0
        %1122 = vmatpush1.bf16.xpose.msra.mxu0 0
        %1123 = vmatprep.subr.bf16.mxu0 0
        %1124 = vmatpush1.bf16.xpose.msra.mxu0 0
        %1125 = vmatprep.subr.bf16.mxu0 0
        %1126 = vmatpush1.bf16.xpose.msra.mxu0 0
        %1127 = vmatprep.subr.bf16.mxu0 0
        %1128 = vmatpush1.bf16.xpose.msra.mxu0 0
        %1129 = vmatprep.subr.bf16.mxu0 0
        %1130 = vmatpush1.bf16.xpose.msra.mxu0 0
        %1131 = vmatprep.mubr.bf16.mxu0 0
        %1132 = vmatmul.mubr.bf16.gmra.mrb[0].mxu0 %v1094
        %v1133 = vpop.f32.mrb[0].mxu0
        %v1134 = vadd.f32 0.0, %v1133
        %v1135 = vpop.f32.mrb[0].mxu0
        %v1136 = vpop.f32.mrb[0].mxu0
        %v1137 = vpop.f32.mrb[0].mxu0
        %1138 = vdwg.mxu0
        %v1140 = vsel %vm755, %v996, 0
        %v1143 = vsel %vm755, %v1000, 0
        %1145 = vmatprep.subr.bf16.mxu0 0
        %1146 = vmatpush1.bf16.xpose.msra.mxu0 %v1143
        %1147 = vmatprep.subr.bf16.mxu0 0
        %1148 = vmatpush1.bf16.xpose.msra.mxu0 0
        %1149 = vmatprep.subr.bf16.mxu0 0
        %1150 = vmatpush1.bf16.xpose.msra.mxu0 0
        %1151 = vmatprep.subr.bf16.mxu0 0
        %1152 = vmatpush1.bf16.xpose.msra.mxu0 0
        %1153 = vmatprep.subr.bf16.mxu0 0
        %1154 = vmatpush1.bf16.xpose.msra.mxu0 0
        %1155 = vmatprep.subr.bf16.mxu0 0
        %1156 = vmatpush1.bf16.xpose.msra.mxu0 0
        %1157 = vmatprep.subr.bf16.mxu0 0
        %1158 = vmatpush1.bf16.xpose.msra.mxu0 0
        %1159 = vmatprep.subr.bf16.mxu0 0
        %1160 = vmatpush1.bf16.xpose.msra.mxu0 0
        %1161 = vmatprep.subr.bf16.mxu0 0
        %1162 = vmatpush1.bf16.xpose.msra.mxu0 0
        %1163 = vmatprep.subr.bf16.mxu0 0
        %1164 = vmatpush1.bf16.xpose.msra.mxu0 0
        %1165 = vmatprep.subr.bf16.mxu0 0
        %1166 = vmatpush1.bf16.xpose.msra.mxu0 0
        %1167 = vmatprep.subr.bf16.mxu0 0
        %1168 = vmatpush1.bf16.xpose.msra.mxu0 0
        %1169 = vmatprep.subr.bf16.mxu0 0
        %1170 = vmatpush1.bf16.xpose.msra.mxu0 0
        %1171 = vmatprep.subr.bf16.mxu0 0
        %1172 = vmatpush1.bf16.xpose.msra.mxu0 0
        %1173 = vmatprep.subr.bf16.mxu0 0
        %1174 = vmatpush1.bf16.xpose.msra.mxu0 0
        %1175 = vmatprep.subr.bf16.mxu0 0
        %1176 = vmatpush1.bf16.xpose.msra.mxu0 0
        %1177 = vmatprep.mubr.bf16.mxu0 0
        %1178 = vmatmul.mubr.bf16.gmra.mrb[0].mxu0 %v1140
        %v1179 = vpop.f32.mrb[0].mxu0
        %v1180 = vadd.f32 0.0, %v1179
        %v1181 = vpop.f32.mrb[0].mxu0
        %v1182 = vpop.f32.mrb[0].mxu0
        %v1183 = vpop.f32.mrb[0].mxu0
        %1184 = vdwg.mxu0
        %1185 = vxpose.xlu0.b32.start [1/16] %v1042, 128
        %1186 = vxpose.xlu0.b32.cont [2/16] %v1088, 128
        %1187 = vxpose.xlu0.b32.cont [3/16] %v1134, 128
        %1188 = vxpose.xlu0.b32.cont [4/16] %v1180, 128
        %1189 = vxpose.xlu0.b32.cont [5/16] 0.0, 128
        %1190 = vxpose.xlu0.b32.cont [6/16] 0.0, 128
        %1191 = vxpose.xlu0.b32.cont [7/16] 0.0, 128
        %1192 = vxpose.xlu0.b32.cont [8/16] 0.0, 128
        %1193 = vxpose.xlu0.b32.cont [9/16] 0.0, 128
        %1194 = vxpose.xlu0.b32.cont [10/16] 0.0, 128
        %1195 = vxpose.xlu0.b32.cont [11/16] 0.0, 128
        %1196 = vxpose.xlu0.b32.cont [12/16] 0.0, 128
        %1197 = vxpose.xlu0.b32.cont [13/16] 0.0, 128
        %1198 = vxpose.xlu0.b32.cont [14/16] 0.0, 128
        %1199 = vxpose.xlu0.b32.cont [15/16] 0.0, 128
        %1200 = vxpose.xlu0.b32.end [16/16] 0.0, 128
        %v1201 = vpop.trf.xlu0
        %v1202 = vpop.trf.xlu0
        %v1203 = vpop.trf.xlu0
        %v1204 = vpop.trf.xlu0
        %v1205 = vpop.trf.xlu0
        %v1206 = vpop.trf.xlu0
        %v1207 = vpop.trf.xlu0
        %v1208 = vpop.trf.xlu0
        %v1209 = vpop.trf.xlu0
        %v1210 = vpop.trf.xlu0
        %v1211 = vpop.trf.xlu0
        %v1212 = vpop.trf.xlu0
        %v1213 = vpop.trf.xlu0
        %v1214 = vpop.trf.xlu0
        %v1215 = vpop.trf.xlu0
        %v1216 = vpop.trf.xlu0
        %v1217 = vpack.c.bf16 %v1201, %v1201
        %v1218 = vld [vmem:[%s3] sm:$0xf]
        %v1219 = vld [vmem:[%s3 + $0x4] sm:$0xf]
        %v1220 = vld [vmem:[%s3 + $0x8] sm:$0xf]
        %v1221 = vld [vmem:[%s3 + $0xc] sm:$0xf]
        %v1226 = vunpack.c.l.b16 %v1218
        %v1227 = vunpack.c.l.b16 %v1219
        %v1228 = vunpack.c.l.b16 %v1220
        %v1229 = vunpack.c.l.b16 %v1221
        %v1230 = vpack.c.b16 %v1227, %v1226
        %v1231 = vpack.c.b16 %v1229, %v1228
        %v1235 = vsel %vm430, %v1217, 0
        %1237 = vmatprep.subr.bf16.mxu0 0
        %1238 = vmatpush1.bf16.msra.mxu0 %v1230
        %1239 = vmatprep.subr.bf16.mxu0 0
        %1240 = vmatpush1.bf16.msra.mxu0 %v1231
        %1241 = vmatprep.subr.bf16.mxu0 0
        %1242 = vmatpush1.bf16.msra.mxu0 0
        %1243 = vmatprep.subr.bf16.mxu0 0
        %1244 = vmatpush1.bf16.msra.mxu0 0
        %1245 = vmatprep.subr.bf16.mxu0 0
        %1246 = vmatpush1.bf16.msra.mxu0 0
        %1247 = vmatprep.subr.bf16.mxu0 0
        %1248 = vmatpush1.bf16.msra.mxu0 0
        %1249 = vmatprep.subr.bf16.mxu0 0
        %1250 = vmatpush1.bf16.msra.mxu0 0
        %1251 = vmatprep.subr.bf16.mxu0 0
        %1252 = vmatpush1.bf16.msra.mxu0 0
        %1253 = vmatprep.subr.bf16.mxu0 0
        %1254 = vmatpush1.bf16.msra.mxu0 0
        %1255 = vmatprep.subr.bf16.mxu0 0
        %1256 = vmatpush1.bf16.msra.mxu0 0
        %1257 = vmatprep.subr.bf16.mxu0 0
        %1258 = vmatpush1.bf16.msra.mxu0 0
        %1259 = vmatprep.subr.bf16.mxu0 0
        %1260 = vmatpush1.bf16.msra.mxu0 0
        %1261 = vmatprep.subr.bf16.mxu0 0
        %1262 = vmatpush1.bf16.msra.mxu0 0
        %1263 = vmatprep.subr.bf16.mxu0 0
        %1264 = vmatpush1.bf16.msra.mxu0 0
        %1265 = vmatprep.subr.bf16.mxu0 0
        %1266 = vmatpush1.bf16.msra.mxu0 0
        %1267 = vmatprep.subr.bf16.mxu0 0
        %1268 = vmatpush1.bf16.msra.mxu0 0
        %1269 = vmatprep.mubr.bf16.mxu0 0
        %1270 = vmatmul.mubr.bf16.gmra.mrb[0].mxu0 %v1235
        %v1271 = vpop.f32.mrb[0].mxu0
        %v1272 = vadd.f32 0.0, %v1271
        %v1273 = vpop.f32.mrb[0].mxu0
        %v1274 = vpop.f32.mrb[0].mxu0
        %v1275 = vpop.f32.mrb[0].mxu0
        %1276 = vdwg.mxu0
        %1277 = vst.msk [vmem:[%s257] sm:$0xff] %vm430, %v1272
        %s1278 = sand.u32 %s164, 1
        %s1279 = scalar_lea.sflag [#allocation3], %s1278
        %s1280 = sand.u32 %s164, 1
        %s1281 = smul.addr %s1280, 8
        %s1282 = scalar_lea.vmem [#allocation2], %s1281
        // Predicated region
        $region45: #{tpu_custom_call.1} parent=43 // pred_check
          %p1283 = pneg %p174
        $region46: #{tpu_custom_call.1} parent=43 // pred_check_branch
          %1285 = sbr.rel (%p1283) target = $region48
        $region47: #{tpu_custom_call.1} parent=43 // pred_region
          %s1287 = ssub.s32 128, 128
          %1288 = vsyncadd %s1279, %s1287
          %s1289 = smul.addr %s20, 128
          %s1290 = scalar_lea.hbm %s6, %s1289
          %s1292 = sshll.u32 %s1282, 4
          %s1293 = int_to_ptr.vmem [resolvable:$true] %s1292
          %1295 = dma.vmem_to_hbm [thread:$0]  %s1293, 128, %s1290, %s1279
        $region48: #{tpu_custom_call.1} parent=43 // pred_fallthru
          _
      $region44: #{tpu_custom_call.1} parent=5 // pred_fallthru
        _
      %p1296 = scmp.le.s32.totalorder 2, %s15
      // Predicated region
      $region49: #{tpu_custom_call.1} parent=5 // pred_check
        %p1297 = pneg %p1296
      $region50: #{tpu_custom_call.1} parent=5 // pred_check_branch
        %1299 = sbr.rel (%p1297) target = $region52
      $region51: #{tpu_custom_call.1} parent=5 // pred_region
        %s1300 = ssub.s32 %s15, 2
        // Predicated region
        $region53: #{tpu_custom_call.1} parent=51 // pred_check
          %p1301 = pneg %p180
        $region54: #{tpu_custom_call.1} parent=51 // pred_check_branch
          %1303 = sbr.rel (%p1301) target = $region56
        $region55: #{tpu_custom_call.1} parent=51 // pred_region
          %s1304 = sand.u32 %s165, 1
          %s1305 = scalar_lea.sflag [#allocation3], %s1304
          %s1306 = sand.u32 %s165, 1
          %s1307 = smul.addr %s1306, 8
          %s1308 = scalar_lea.vmem [#allocation2], %s1307
          %1309 = dma.done %s1305, 128
        $region56: #{tpu_custom_call.1} parent=51 // pred_fallthru
          _
      $region52: #{tpu_custom_call.1} parent=5 // pred_fallthru
        _
    $region6: #{tpu_custom_call.1} parent=1 // loop_footer
      %s19 = sadd.s32 1, %s15
    $region7: #{tpu_custom_call.1} parent=1 // loop_footer_branch
      %14 = sbr.rel target = $region3
    $region8: #{tpu_custom_call.1} parent=1 // loop_exit
      _
    %1310 = vsyncpa [#allocation3], 1
    %s1311 = scalar_lea.sflag [#allocation3], 1
    %1312 = vsyncpa %s1311, 1

</llo_original>
